<compile_context>
chip_gen: v7x
topology: tpu7x:2x2x1
jax: 0.10.0
libtpu: 0.0.40
codegen_flags: <defaults>
</compile_context>

<pallas_src>
import functools

import jax
import jax.numpy as jnp
from jax.experimental import pallas as pl
from jax.experimental.pallas import tpu as pltpu

D_TXT = 768          # BERT CLS feature width
D_IMG = 1000         # resnet152 logit width
D_HID = 128
N_CLS = 3
N_LANE = 128         # lane-padded classifier width (columns >= 3 are zero)


def _cdiv(a, b):
    return -(-a // b)


def _round_up(x, m):
    return _cdiv(x, m) * m


def _head_kernel(txt_ref, img_ref,
                 wt_ref, bt_ref,     # t_linear: 768 -> 128   (bf16 weight, f32 bias)
                 wi_ref, bi_ref,     # i_linear: 1000 -> 128  (bf16 weight, f32 bias)
                 wc_ref, bc_ref,     # fused classifiers: 256 -> 128 (lane-padded)
                 out_ref):
    # f32 activations straight from HBM; cast to bf16 in-kernel for the MXU.
    txt = jnp.dot(txt_ref[...].astype(jnp.bfloat16), wt_ref[...],
                  preferred_element_type=jnp.float32) + bt_ref[...]
    txt = jnp.maximum(txt, 0.0)

    img = jnp.dot(img_ref[...].astype(jnp.bfloat16), wi_ref[...],
                  preferred_element_type=jnp.float32) + bi_ref[...]
    img = jnp.maximum(img, 0.0)

    # Fused classifier heads: a single K=256 MXU op; the 0.5 late-fusion scale and
    # both biases are already folded into wc/bc at prep time.
    hid = jnp.concatenate([txt, img], axis=-1).astype(jnp.bfloat16)   # (tb, 256)
    out = jnp.dot(hid, wc_ref[...], preferred_element_type=jnp.float32) + bc_ref[...]
    out_ref[...] = out[:, :N_CLS].astype(out_ref.dtype)               # narrow store


def _hw_defaults():
    """Per-generation batch-tile cap and scoped-VMEM limit."""
    try:
        info = pltpu.get_tpu_info()
        vmem_phys = getattr(info, "vmem_capacity_bytes", 64 * 1024 * 1024)
    except Exception:
        vmem_phys = 64 * 1024 * 1024
    if vmem_phys >= 96 * 1024 * 1024:          # v5e / v6e: 128 MiB physical VMEM
        return 2048, 96 * 1024 * 1024
    return 1024, 48 * 1024 * 1024              # v7x (64 MiB physical) and fallback


def _batch_tile(B, block_b):
    """Batch tile: aim for ~8 grid steps (pipelining + megacore), 256-row granules,
    capped per generation; tiny batches use one full-extent block."""
    if B <= 8:
        return B
    tb = _round_up(_cdiv(B, 8), 256)
    tb = min(tb, block_b, _round_up(B, 8))
    return max(8, _round_up(tb, 8))


def bert_res_late_head(txt_feat, img_feat, prepared_params, *, block_b=None,
                       vmem_limit_bytes=None):
    """txt_feat: [B, 768] f32 (BERT CLS feature), img_feat: [B, 1000] f32
    (resnet152 logits) -> [B, 3] f32."""
    B = txt_feat.shape[0]
    wt, bt, wi, bi, wc, bc = prepared_params

    default_block_b, default_vmem = _hw_defaults()
    if block_b is None:
        block_b = default_block_b
    if vmem_limit_bytes is None:
        vmem_limit_bytes = default_vmem

    tb = _batch_tile(B, block_b)
    grid = (_cdiv(B, tb),)       # non-divisible batch -> masked last block (no padding)

    row = lambda d: pl.BlockSpec((tb, d), lambda i: (i, 0))        # batch-tiled
    const = lambda s: pl.BlockSpec(s, lambda i: (0,) * len(s))     # VMEM-resident

    flops = 2 * B * (D_TXT * D_HID + D_IMG * D_HID + 2 * D_HID * N_LANE)
    bytes_accessed = (B * (D_TXT + D_IMG) * 4 + B * N_CLS * 4
                      + (D_TXT + D_IMG + 2 * D_HID) * D_HID * 2    # bf16 weights
                      + 3 * N_LANE * 4)                            # f32 biases

    return pl.pallas_call(
        _head_kernel,
        out_shape=jax.ShapeDtypeStruct((B, N_CLS), jnp.float32),
        grid=grid,
        in_specs=[
            row(D_TXT), row(D_IMG),
            const(wt.shape), const(bt.shape),
            const(wi.shape), const(bi.shape),
            const(wc.shape), const(bc.shape),
        ],
        out_specs=row(N_CLS),
        compiler_params=pltpu.CompilerParams(
            dimension_semantics=("parallel",),        # megacore sharding on v7x
            vmem_limit_bytes=vmem_limit_bytes),
        cost_estimate=pl.CostEstimate(flops=int(flops), transcendentals=0,
                                      bytes_accessed=int(bytes_accessed)),
    )(txt_feat, img_feat, wt, bt, wi, bi, wc, bc)


def init_params(key):
    """Deterministic init of the module's own parameters (f32, PyTorch Linear
    weights pre-transposed to [in, out])."""
    ks = jax.random.split(key, 8)

    def linear(kw, kb, d_in, d_out):
        bound = 1.0 / (d_in ** 0.5)
        w_t = jax.random.uniform(kw, (d_in, d_out), jnp.float32, -bound, bound)
        b = jax.random.uniform(kb, (1, d_out), jnp.float32, -bound, bound)
        return w_t, b

    wt, bt = linear(ks[0], ks[1], D_TXT, D_HID)        # t_linear
    wi, bi = linear(ks[2], ks[3], D_IMG, D_HID)        # i_linear
    wft, bft = linear(ks[4], ks[5], D_HID, N_CLS)      # fc_txt
    wfi, bfi = linear(ks[6], ks[7], D_HID, N_CLS)      # fc_img
    return (wt, bt, wi, bi, wft, bft, wfi, bfi)


def prepare_params(raw):
    """One-time prep: bf16 first-layer weights (natural shapes), classifier heads
    fused+lane-padded to [256,128] bf16 with the 0.5 scale folded in, fused bias."""
    wt, bt, wi, bi, wft, bft, wfi, bfi = raw
    wt_b = wt.astype(jnp.bfloat16)                     # (768, 128)
    wi_b = wi.astype(jnp.bfloat16)                     # (1000, 128) — no padding
    wc = jnp.zeros((2 * D_HID, N_LANE), jnp.float32)
    wc = wc.at[:D_HID, :N_CLS].set(0.5 * wft)
    wc = wc.at[D_HID:, :N_CLS].set(0.5 * wfi)
    bc = jnp.zeros((1, N_LANE), jnp.float32).at[:, :N_CLS].set(0.5 * (bft + bfi))
    return (wt_b, bt, wi_b, bi, wc.astype(jnp.bfloat16), bc)


def reference(txt_feat, img_feat, raw):
    """Pure-JAX reference mirroring the kernel's bf16 quantization of activations
    and weights (all accumulation and bias/relu math in f32)."""
    wt, bt, wi, bi, wft, bft, wfi, bfi = raw
    f32 = jnp.float32
    dot = functools.partial(jnp.dot, precision=jax.lax.Precision.HIGHEST)

    t_in = txt_feat.astype(jnp.bfloat16).astype(f32)
    i_in = img_feat.astype(jnp.bfloat16).astype(f32)
    wt_q = wt.astype(jnp.bfloat16).astype(f32)
    wi_q = wi.astype(jnp.bfloat16).astype(f32)

    t = jnp.maximum(dot(t_in, wt_q) + bt, 0.0)
    i = jnp.maximum(dot(i_in, wi_q) + bi, 0.0)

    t_q = t.astype(jnp.bfloat16).astype(f32)
    i_q = i.astype(jnp.bfloat16).astype(f32)
    wft_q = wft.astype(jnp.bfloat16).astype(f32)
    wfi_q = wfi.astype(jnp.bfloat16).astype(f32)
    return ((dot(t_q, wft_q) + bft) + (dot(i_q, wfi_q) + bfi)) / 2.0


if __name__ == "__main__":
    key = jax.random.PRNGKey(0)
    k_p, k_t, k_i = jax.random.split(key, 3)

    raw_params = init_params(k_p)
    params = prepare_params(raw_params)

    # --- small shape check (batch=2, single full-extent block) ------------------
    B = 2
    txt_feat = jax.random.normal(k_t, (B, D_TXT), jnp.float32)      # BERT CLS stand-in
    img_feat = jax.random.normal(k_i, (B, D_IMG), jnp.float32)      # resnet152 stand-in
    out = jax.block_until_ready(bert_res_late_head(txt_feat, img_feat, params))
    ref = reference(txt_feat, img_feat, raw_params)
    assert out.shape == (B, N_CLS)
    assert jnp.allclose(out, ref, atol=1e-2, rtol=1e-2), (out, ref)

    # --- multi-step grid (divisible batch, exercises pipelining) ----------------
    B2 = 96
    k_t2, k_i2 = jax.random.split(jax.random.PRNGKey(1))
    txt2 = jax.random.normal(k_t2, (B2, D_TXT), jnp.float32)
    img2 = jax.random.normal(k_i2, (B2, D_IMG), jnp.float32)
    out2 = jax.block_until_ready(bert_res_late_head(txt2, img2, params, block_b=32))
    assert out2.shape == (B2, N_CLS)
    assert jnp.allclose(out2, reference(txt2, img2, raw_params), atol=1e-2, rtol=1e-2)

    # --- non-divisible batch (masked last block, no padding pre-pass) -----------
    B3 = 50
    k_t3, k_i3 = jax.random.split(jax.random.PRNGKey(2))
    txt3 = jax.random.normal(k_t3, (B3, D_TXT), jnp.float32)
    img3 = jax.random.normal(k_i3, (B3, D_IMG), jnp.float32)
    out3 = jax.block_until_ready(bert_res_late_head(txt3, img3, params, block_b=16))
    assert out3.shape == (B3, N_CLS)
    assert jnp.allclose(out3, reference(txt3, img3, raw_params), atol=1e-2, rtol=1e-2)

    print("KERNEL_OK")
</pallas_src>

<mosaic_0001>
module attributes {stable_mosaic.version = 11 : i64} {
  func.func @_head_kernel(%arg0: i32, %arg1: memref<2x768xf32, #tpu.memory_space<vmem>>, %arg2: memref<2x1000xf32, #tpu.memory_space<vmem>>, %arg3: memref<768x128xbf16, #tpu.memory_space<vmem>>, %arg4: memref<1x128xf32, #tpu.memory_space<vmem>>, %arg5: memref<1000x128xbf16, #tpu.memory_space<vmem>>, %arg6: memref<1x128xf32, #tpu.memory_space<vmem>>, %arg7: memref<256x128xbf16, #tpu.memory_space<vmem>>, %arg8: memref<1x128xf32, #tpu.memory_space<vmem>>, %arg9: memref<2x3xf32, #tpu.memory_space<vmem>>) attributes {dimension_semantics = [#tpu.dimension_semantics<parallel>], iteration_bounds = array<i64: 1>, scalar_prefetch = 0 : i64, scratch_operands = 0 : i64, tpu.core_type = #tpu.core_type<tc>, window_params = [{transform_indices = @transform_0, window_bounds = array<i64: 2, 768>}, {transform_indices = @transform_1, window_bounds = array<i64: 2, 1000>}, {pipeline_mode = #tpu.pipeline_mode<synchronous>, transform_indices = @transform_2, window_bounds = array<i64: 768, 128>}, {pipeline_mode = #tpu.pipeline_mode<synchronous>, transform_indices = @transform_3, window_bounds = array<i64: 1, 128>}, {pipeline_mode = #tpu.pipeline_mode<synchronous>, transform_indices = @transform_4, window_bounds = array<i64: 1000, 128>}, {pipeline_mode = #tpu.pipeline_mode<synchronous>, transform_indices = @transform_5, window_bounds = array<i64: 1, 128>}, {pipeline_mode = #tpu.pipeline_mode<synchronous>, transform_indices = @transform_6, window_bounds = array<i64: 256, 128>}, {pipeline_mode = #tpu.pipeline_mode<synchronous>, transform_indices = @transform_7, window_bounds = array<i64: 1, 128>}, {transform_indices = @transform_8, window_bounds = array<i64: 2, 3>}]} {
    %c0 = arith.constant 0 : index
    %c0_0 = arith.constant 0 : index
    %0 = vector.load %arg1[%c0, %c0_0] : memref<2x768xf32, #tpu.memory_space<vmem>>, vector<2x768xf32>
    %1 = arith.truncf %0 : vector<2x768xf32> to vector<2x768xbf16>
    %c0_1 = arith.constant 0 : index
    %c0_2 = arith.constant 0 : index
    %2 = vector.load %arg3[%c0_1, %c0_2] : memref<768x128xbf16, #tpu.memory_space<vmem>>, vector<768x128xbf16>
    %cst = arith.constant dense<0.000000e+00> : vector<2x128xf32>
    %3 = tpu.matmul %1, %2, %cst {dimension_numbers = #tpu.dot_dimension_numbers<[1], [0], [0], [1], [0, 0, 1, 1], [], []>} : vector<2x768xbf16>, vector<768x128xbf16>, vector<2x128xf32> -> vector<2x128xf32>
    %c0_3 = arith.constant 0 : index
    %c0_4 = arith.constant 0 : index
    %4 = vector.load %arg4[%c0_3, %c0_4] : memref<1x128xf32, #tpu.memory_space<vmem>>, vector<1x128xf32>
    %5 = vector.broadcast %4 : vector<1x128xf32> to vector<2x128xf32>
    %6 = arith.addf %3, %5 : vector<2x128xf32>
    %cst_5 = arith.constant 0.000000e+00 : f32
    %7 = vector.broadcast %cst_5 : f32 to vector<2x128xf32>
    %8 = arith.maximumf %6, %7 : vector<2x128xf32>
    %c0_6 = arith.constant 0 : index
    %c0_7 = arith.constant 0 : index
    %9 = vector.load %arg2[%c0_6, %c0_7] : memref<2x1000xf32, #tpu.memory_space<vmem>>, vector<2x1000xf32>
    %10 = arith.truncf %9 : vector<2x1000xf32> to vector<2x1000xbf16>
    %c0_8 = arith.constant 0 : index
    %c0_9 = arith.constant 0 : index
    %11 = vector.load %arg5[%c0_8, %c0_9] : memref<1000x128xbf16, #tpu.memory_space<vmem>>, vector<1000x128xbf16>
    %cst_10 = arith.constant dense<0.000000e+00> : vector<2x128xf32>
    %12 = tpu.matmul %10, %11, %cst_10 {dimension_numbers = #tpu.dot_dimension_numbers<[1], [0], [0], [1], [0, 0, 1, 1], [], []>} : vector<2x1000xbf16>, vector<1000x128xbf16>, vector<2x128xf32> -> vector<2x128xf32>
    %c0_11 = arith.constant 0 : index
    %c0_12 = arith.constant 0 : index
    %13 = vector.load %arg6[%c0_11, %c0_12] : memref<1x128xf32, #tpu.memory_space<vmem>>, vector<1x128xf32>
    %14 = vector.broadcast %13 : vector<1x128xf32> to vector<2x128xf32>
    %15 = arith.addf %12, %14 : vector<2x128xf32>
    %cst_13 = arith.constant 0.000000e+00 : f32
    %16 = vector.broadcast %cst_13 : f32 to vector<2x128xf32>
    %17 = arith.maximumf %15, %16 : vector<2x128xf32>
    %18 = tpu.concatenate %8, %17 in 1 : vector<2x128xf32>, vector<2x128xf32> -> vector<2x256xf32>
    %19 = arith.truncf %18 : vector<2x256xf32> to vector<2x256xbf16>
    %c0_14 = arith.constant 0 : index
    %c0_15 = arith.constant 0 : index
    %20 = vector.load %arg7[%c0_14, %c0_15] : memref<256x128xbf16, #tpu.memory_space<vmem>>, vector<256x128xbf16>
    %cst_16 = arith.constant dense<0.000000e+00> : vector<2x128xf32>
    %21 = tpu.matmul %19, %20, %cst_16 {dimension_numbers = #tpu.dot_dimension_numbers<[1], [0], [0], [1], [0, 0, 1, 1], [], []>} : vector<2x256xbf16>, vector<256x128xbf16>, vector<2x128xf32> -> vector<2x128xf32>
    %c0_17 = arith.constant 0 : index
    %c0_18 = arith.constant 0 : index
    %22 = vector.load %arg8[%c0_17, %c0_18] : memref<1x128xf32, #tpu.memory_space<vmem>>, vector<1x128xf32>
    %23 = vector.broadcast %22 : vector<1x128xf32> to vector<2x128xf32>
    %24 = arith.addf %21, %23 : vector<2x128xf32>
    %25 = vector.extract_strided_slice %24 {offsets = [0, 0], sizes = [2, 3], strides = [1, 1]} : vector<2x128xf32> to vector<2x3xf32>
    %c0_19 = arith.constant 0 : index
    %c0_20 = arith.constant 0 : index
    %26 = vector.load %arg9[%c0_19, %c0_20] : memref<2x3xf32, #tpu.memory_space<vmem>>, vector<2x3xf32>
    tpu.vector_store %arg9[%c0_19, %c0_20], %25 {strides = array<i32>} : memref<2x3xf32, #tpu.memory_space<vmem>>, vector<2x3xf32>,
    return
  }
  func.func @transform_0(%arg0: i32) -> (i32, i32) {
    %c0_i32 = arith.constant 0 : i32
    %c0_i32_0 = arith.constant 0 : i32
    return %arg0, %c0_i32 : i32, i32
  }
  func.func @transform_1(%arg0: i32) -> (i32, i32) {
    %c0_i32 = arith.constant 0 : i32
    %c0_i32_0 = arith.constant 0 : i32
    return %arg0, %c0_i32 : i32, i32
  }
  func.func @transform_2(%arg0: i32) -> (i32, i32) {
    %c0_i32 = arith.constant 0 : i32
    %c0_i32_0 = arith.constant 0 : i32
    %c0_i32_1 = arith.constant 0 : i32
    return %c0_i32, %c0_i32_0 : i32, i32
  }
  func.func @transform_3(%arg0: i32) -> (i32, i32) {
    %c0_i32 = arith.constant 0 : i32
    %c0_i32_0 = arith.constant 0 : i32
    %c0_i32_1 = arith.constant 0 : i32
    return %c0_i32, %c0_i32_0 : i32, i32
  }
  func.func @transform_4(%arg0: i32) -> (i32, i32) {
    %c0_i32 = arith.constant 0 : i32
    %c0_i32_0 = arith.constant 0 : i32
    %c0_i32_1 = arith.constant 0 : i32
    return %c0_i32, %c0_i32_0 : i32, i32
  }
  func.func @transform_5(%arg0: i32) -> (i32, i32) {
    %c0_i32 = arith.constant 0 : i32
    %c0_i32_0 = arith.constant 0 : i32
    %c0_i32_1 = arith.constant 0 : i32
    return %c0_i32, %c0_i32_0 : i32, i32
  }
  func.func @transform_6(%arg0: i32) -> (i32, i32) {
    %c0_i32 = arith.constant 0 : i32
    %c0_i32_0 = arith.constant 0 : i32
    %c0_i32_1 = arith.constant 0 : i32
    return %c0_i32, %c0_i32_0 : i32, i32
  }
  func.func @transform_7(%arg0: i32) -> (i32, i32) {
    %c0_i32 = arith.constant 0 : i32
    %c0_i32_0 = arith.constant 0 : i32
    %c0_i32_1 = arith.constant 0 : i32
    return %c0_i32, %c0_i32_0 : i32, i32
  }
  func.func @transform_8(%arg0: i32) -> (i32, i32) {
    %c0_i32 = arith.constant 0 : i32
    %c0_i32_0 = arith.constant 0 : i32
    return %arg0, %c0_i32 : i32, i32
  }
}

</mosaic_0001>

<llo_original>
// kernel: tpu_custom_call.1
$region0: #{tpu_custom_call.1}
  #allocation0 [shape = 'u32[]', space=smem, size = 0x4, offset = 0x4, fixed_abs, tag = 'smem constant byte address 0x4 - core index']
  #allocation1 [shape = 'u32[144,128]{1,0:T(1,128)}', space=vmem, size = 0x12000, scoped, tag = 'internal scratch']
  %s0 = inlined_call_operand.hbm [shape: f32[2,768], index: 0, kind: input, shape index: {}]
  %s1 = inlined_call_operand.hbm [shape: f32[2,1000], index: 1, kind: input, shape index: {}]
  %s2 = inlined_call_operand.hbm [shape: bf16[768,128], index: 2, kind: input, shape index: {}]
  %s3 = inlined_call_operand.vmem [shape: f32[1,128], index: 3, kind: input, shape index: {}]
  %s4 = inlined_call_operand.hbm [shape: bf16[1000,128], index: 4, kind: input, shape index: {}]
  %s5 = inlined_call_operand.vmem [shape: f32[1,128], index: 5, kind: input, shape index: {}]
  %s6 = inlined_call_operand.hbm [shape: bf16[256,128], index: 6, kind: input, shape index: {}]
  %s7 = inlined_call_operand.vmem [shape: f32[1,128], index: 7, kind: input, shape index: {}]
  %s8 = inlined_call_operand.hbm [shape: f32[2,3], index: 8, kind: output, shape index: {}]
  %s9 = sld [smem:[#allocation0]]
  $region62: #{tpu_custom_call.1} parent=0
    _
  %s11 = ssub.s32 1, %s9
  %s12 = scalar_select 0, %s11, %s9
  $region1: #{tpu_custom_call.1} parent=0
    #allocation2 [shape = 'u8[6144]{0}', space=vmem, size = 0x1800, scoped, tag = 'input window, operand 0, single buffered']
    #allocation3 [shape = 's32[1]{0}', space=sflag, size = 0x4, scoped, tag = 'scoped memory for tpu_custom_call.1']
    #allocation4 [shape = 's32[1]{0}', space=sflag, size = 0x4, scoped, tag = 'scoped memory for tpu_custom_call.1']
    #allocation5 [shape = 'u8[8192]{0}', space=vmem, size = 0x2000, scoped, tag = 'input window, operand 1, single buffered']
    #allocation6 [shape = 's32[1]{0}', space=sflag, size = 0x4, scoped, tag = 'scoped memory for tpu_custom_call.1']
    #allocation7 [shape = 'u8[196608]{0}', space=vmem, size = 0x30000, scoped, tag = 'input window, operand 2, single buffered']
    #allocation8 [shape = 'u8[256000]{0}', space=vmem, size = 0x3e800, scoped, tag = 'input window, operand 4, single buffered']
    #allocation9 [shape = 's32[1]{0}', space=sflag, size = 0x4, scoped, tag = 'scoped memory for tpu_custom_call.1']
    #allocation10 [shape = 'u8[65536]{0}', space=vmem, size = 0x10000, scoped, tag = 'input window, operand 6, single buffered']
    #allocation11 [shape = 'u8[1024]{0}', space=vmem, size = 0x400, scoped, tag = 'output window, operand 0, single buffered']
    %13 = vsyncpa [#allocation3], 0
    %14 = vsyncpa [#allocation6], 0
    %15 = vsyncpa [#allocation9], 0
    %16 = vsyncpa [#allocation4], 0
    // Predicated region
    $region2: #{tpu_custom_call.1} parent=1 // pred_check
      _
    $region3: #{tpu_custom_call.1} parent=1 // pred_check_branch
      %18 = sbr.rel (0) target = $region5
    $region4: #{tpu_custom_call.1} parent=1 // pred_region
      %s20 = ssub.s32 192, 192
      %21 = vsyncadd [#allocation3], %s20
      %s23 = sshll.u32 [#allocation2], 4
      %s24 = int_to_ptr.vmem [resolvable:$true] %s23
      %26 = dma.hbm_to_vmem [thread:$0]  %s0, 192, %s24, [#allocation3]
    $region5: #{tpu_custom_call.1} parent=1 // pred_fallthru
      _
    // Predicated region
    $region6: #{tpu_custom_call.1} parent=1 // pred_check
      _
    $region7: #{tpu_custom_call.1} parent=1 // pred_check_branch
      %28 = sbr.rel (0) target = $region9
    $region8: #{tpu_custom_call.1} parent=1 // pred_region
      %s30 = ssub.s32 256, 256
      %31 = vsyncadd [#allocation6], %s30
      %s33 = sshll.u32 [#allocation5], 4
      %s34 = int_to_ptr.vmem [resolvable:$true] %s33
      %36 = dma.hbm_to_vmem [thread:$0]  %s1, 256, %s34, [#allocation6]
    $region9: #{tpu_custom_call.1} parent=1 // pred_fallthru
      _
    // Predicated region
    $region10: #{tpu_custom_call.1} parent=1 // pred_check
      _
    $region11: #{tpu_custom_call.1} parent=1 // pred_check_branch
      %38 = sbr.rel (0) target = $region13
    $region12: #{tpu_custom_call.1} parent=1 // pred_region
      %s40 = ssub.s32 6144, 6144
      %41 = vsyncadd [#allocation6], %s40
      %s42 = sshll.u32 [#allocation7], 4
      %s43 = int_to_ptr.vmem [resolvable:$true] %s42
      %48 = dma.hbm_to_vmem [thread:$0]  %s2, 6144, %s43, [#allocation6], 64, 64, 4
    $region13: #{tpu_custom_call.1} parent=1 // pred_fallthru
      _
    // Predicated region
    $region14: #{tpu_custom_call.1} parent=1 // pred_check
      _
    $region15: #{tpu_custom_call.1} parent=1 // pred_check_branch
      %50 = sbr.rel (0) target = $region17
    $region16: #{tpu_custom_call.1} parent=1 // pred_region
      _
    $region17: #{tpu_custom_call.1} parent=1 // pred_fallthru
      _
    // Predicated region
    $region18: #{tpu_custom_call.1} parent=1 // pred_check
      _
    $region19: #{tpu_custom_call.1} parent=1 // pred_check_branch
      %52 = sbr.rel (0) target = $region21
    $region20: #{tpu_custom_call.1} parent=1 // pred_region
      %s54 = ssub.s32 8000, 8000
      %55 = vsyncadd [#allocation9], %s54
      %s56 = sshll.u32 [#allocation8], 4
      %s57 = int_to_ptr.vmem [resolvable:$true] %s56
      %62 = dma.hbm_to_vmem [thread:$0]  %s4, 8000, %s57, [#allocation9], 64, 64, 4
    $region21: #{tpu_custom_call.1} parent=1 // pred_fallthru
      _
    // Predicated region
    $region22: #{tpu_custom_call.1} parent=1 // pred_check
      _
    $region23: #{tpu_custom_call.1} parent=1 // pred_check_branch
      %64 = sbr.rel (0) target = $region25
    $region24: #{tpu_custom_call.1} parent=1 // pred_region
      _
    $region25: #{tpu_custom_call.1} parent=1 // pred_fallthru
      _
    // Predicated region
    $region26: #{tpu_custom_call.1} parent=1 // pred_check
      _
    $region27: #{tpu_custom_call.1} parent=1 // pred_check_branch
      %66 = sbr.rel (0) target = $region29
    $region28: #{tpu_custom_call.1} parent=1 // pred_region
      %s68 = ssub.s32 2048, 2048
      %69 = vsyncadd [#allocation9], %s68
      %s70 = sshll.u32 [#allocation10], 4
      %s71 = int_to_ptr.vmem [resolvable:$true] %s70
      %76 = dma.hbm_to_vmem [thread:$0]  %s6, 2048, %s71, [#allocation9], 64, 64, 4
    $region29: #{tpu_custom_call.1} parent=1 // pred_fallthru
      _
    // Predicated region
    $region30: #{tpu_custom_call.1} parent=1 // pred_check
      _
    $region31: #{tpu_custom_call.1} parent=1 // pred_check_branch
      %78 = sbr.rel (0) target = $region33
    $region32: #{tpu_custom_call.1} parent=1 // pred_region
      _
    $region33: #{tpu_custom_call.1} parent=1 // pred_fallthru
      _
    // Predicated region
    $region34: #{tpu_custom_call.1} parent=1 // pred_check
      _
    $region35: #{tpu_custom_call.1} parent=1 // pred_check_branch
      %80 = sbr.rel (0) target = $region37
    $region36: #{tpu_custom_call.1} parent=1 // pred_region
      %81 = dma.done [#allocation3], 192
    $region37: #{tpu_custom_call.1} parent=1 // pred_fallthru
      _
    // Predicated region
    $region38: #{tpu_custom_call.1} parent=1 // pred_check
      _
    $region39: #{tpu_custom_call.1} parent=1 // pred_check_branch
      %83 = sbr.rel (0) target = $region41
    $region40: #{tpu_custom_call.1} parent=1 // pred_region
      %84 = dma.done [#allocation6], 256
    $region41: #{tpu_custom_call.1} parent=1 // pred_fallthru
      _
    // Predicated region
    $region42: #{tpu_custom_call.1} parent=1 // pred_check
      _
    $region43: #{tpu_custom_call.1} parent=1 // pred_check_branch
      %86 = sbr.rel (0) target = $region45
    $region44: #{tpu_custom_call.1} parent=1 // pred_region
      %87 = dma.done [#allocation6], 6144
    $region45: #{tpu_custom_call.1} parent=1 // pred_fallthru
      _
    // Predicated region
    $region46: #{tpu_custom_call.1} parent=1 // pred_check
      _
    $region47: #{tpu_custom_call.1} parent=1 // pred_check_branch
      %89 = sbr.rel (0) target = $region49
    $region48: #{tpu_custom_call.1} parent=1 // pred_region
      %90 = dma.done [#allocation9], 8000
    $region49: #{tpu_custom_call.1} parent=1 // pred_fallthru
      _
    // Predicated region
    $region50: #{tpu_custom_call.1} parent=1 // pred_check
      _
    $region51: #{tpu_custom_call.1} parent=1 // pred_check_branch
      %92 = sbr.rel (0) target = $region53
    $region52: #{tpu_custom_call.1} parent=1 // pred_region
      %93 = dma.done [#allocation9], 2048
    $region53: #{tpu_custom_call.1} parent=1 // pred_fallthru
      _
    %v95 = vld [vmem:[#allocation2] sm:$0xff]
    %v96 = vld [vmem:[#allocation2 + $0x8] sm:$0xf]
    %v99 = vcombine.high %v95, %v95
    %v101 = vunpack.c.l.s4 1983009808
    %v102 = vunpack.c.0.s8 %v101
    %v103 = vlaneseq
    %v104 = vshrl.u32 %v103, 7
    %v105 = vsub.s32 %v102, %v104
    %v106 = vrot.slane %v95, %v105
    %v108 = vunpack.c.l.s4 1983009808
    %v109 = vunpack.c.0.s8 %v108
    %v110 = vlaneseq
    %v111 = vshrl.u32 %v110, 7
    %v112 = vsub.s32 %v109, %v111
    %v113 = vrot.slane %v99, %v112
    %v114 = vcombine.high %v106, %v106
    %v115 = vcombine.high %v113, %v113
    %v117 = vunpack.c.l.s4 1983009808
    %v118 = vunpack.c.0.s8 %v117
    %v119 = vlaneseq
    %v120 = vshrl.u32 %v119, 7
    %v121 = vsub.s32 %v118, %v120
    %v122 = vrot.slane %v96, %v121
    %v123 = vcombine.high %v122, %v122
    %v130 = vpack.c.bf16 %v106, %v106
    %v131 = vpack.c.bf16 %v114, %v114
    %v132 = vpack.c.bf16 %v113, %v113
    %v133 = vpack.c.bf16 %v115, %v115
    %v134 = vpack.c.bf16 %v122, %v122
    %v135 = vpack.c.bf16 %v123, %v123
    %v136 = vld [vmem:[#allocation7] sm:$0xf]
    %v137 = vld [vmem:[#allocation7 + $0x4] sm:$0xf]
    %v138 = vld [vmem:[#allocation7 + $0x8] sm:$0xf]
    %v139 = vld [vmem:[#allocation7 + $0xc] sm:$0xf]
    %v140 = vld [vmem:[#allocation7 + $0x10] sm:$0xf]
    %v141 = vld [vmem:[#allocation7 + $0x14] sm:$0xf]
    %v142 = vld [vmem:[#allocation7 + $0x18] sm:$0xf]
    %v143 = vld [vmem:[#allocation7 + $0x1c] sm:$0xf]
    %v144 = vld [vmem:[#allocation7 + $0x20] sm:$0xf]
    %v145 = vld [vmem:[#allocation7 + $0x24] sm:$0xf]
    %v146 = vld [vmem:[#allocation7 + $0x28] sm:$0xf]
    %v147 = vld [vmem:[#allocation7 + $0x2c] sm:$0xf]
    %v148 = vld [vmem:[#allocation7 + $0x30] sm:$0xf]
    %v149 = vld [vmem:[#allocation7 + $0x34] sm:$0xf]
    %v150 = vld [vmem:[#allocation7 + $0x38] sm:$0xf]
    %v151 = vld [vmem:[#allocation7 + $0x3c] sm:$0xf]
    %v152 = vld [vmem:[#allocation7 + $0x40] sm:$0xf]
    %v153 = vld [vmem:[#allocation7 + $0x44] sm:$0xf]
    %v154 = vld [vmem:[#allocation7 + $0x48] sm:$0xf]
    %v155 = vld [vmem:[#allocation7 + $0x4c] sm:$0xf]
    %v156 = vld [vmem:[#allocation7 + $0x50] sm:$0xf]
    %v157 = vld [vmem:[#allocation7 + $0x54] sm:$0xf]
    %v158 = vld [vmem:[#allocation7 + $0x58] sm:$0xf]
    %v159 = vld [vmem:[#allocation7 + $0x5c] sm:$0xf]
    %v160 = vld [vmem:[#allocation7 + $0x60] sm:$0xf]
    %v161 = vld [vmem:[#allocation7 + $0x64] sm:$0xf]
    %v162 = vld [vmem:[#allocation7 + $0x68] sm:$0xf]
    %v163 = vld [vmem:[#allocation7 + $0x6c] sm:$0xf]
    %v164 = vld [vmem:[#allocation7 + $0x70] sm:$0xf]
    %v165 = vld [vmem:[#allocation7 + $0x74] sm:$0xf]
    %v166 = vld [vmem:[#allocation7 + $0x78] sm:$0xf]
    %v167 = vld [vmem:[#allocation7 + $0x7c] sm:$0xf]
    %v168 = vld [vmem:[#allocation7 + $0x80] sm:$0xf]
    %v169 = vld [vmem:[#allocation7 + $0x84] sm:$0xf]
    %v170 = vld [vmem:[#allocation7 + $0x88] sm:$0xf]
    %v171 = vld [vmem:[#allocation7 + $0x8c] sm:$0xf]
    %v172 = vld [vmem:[#allocation7 + $0x90] sm:$0xf]
    %v173 = vld [vmem:[#allocation7 + $0x94] sm:$0xf]
    %v174 = vld [vmem:[#allocation7 + $0x98] sm:$0xf]
    %v175 = vld [vmem:[#allocation7 + $0x9c] sm:$0xf]
    %v176 = vld [vmem:[#allocation7 + $0xa0] sm:$0xf]
    %v177 = vld [vmem:[#allocation7 + $0xa4] sm:$0xf]
    %v178 = vld [vmem:[#allocation7 + $0xa8] sm:$0xf]
    %v179 = vld [vmem:[#allocation7 + $0xac] sm:$0xf]
    %v180 = vld [vmem:[#allocation7 + $0xb0] sm:$0xf]
    %v181 = vld [vmem:[#allocation7 + $0xb4] sm:$0xf]
    %v182 = vld [vmem:[#allocation7 + $0xb8] sm:$0xf]
    %v183 = vld [vmem:[#allocation7 + $0xbc] sm:$0xf]
    %v184 = vld [vmem:[#allocation7 + $0xc0] sm:$0xf]
    %v185 = vld [vmem:[#allocation7 + $0xc4] sm:$0xf]
    %v186 = vld [vmem:[#allocation7 + $0xc8] sm:$0xf]
    %v187 = vld [vmem:[#allocation7 + $0xcc] sm:$0xf]
    %v188 = vld [vmem:[#allocation7 + $0xd0] sm:$0xf]
    %v189 = vld [vmem:[#allocation7 + $0xd4] sm:$0xf]
    %v190 = vld [vmem:[#allocation7 + $0xd8] sm:$0xf]
    %v191 = vld [vmem:[#allocation7 + $0xdc] sm:$0xf]
    %v192 = vld [vmem:[#allocation7 + $0xe0] sm:$0xf]
    %v193 = vld [vmem:[#allocation7 + $0xe4] sm:$0xf]
    %v194 = vld [vmem:[#allocation7 + $0xe8] sm:$0xf]
    %v195 = vld [vmem:[#allocation7 + $0xec] sm:$0xf]
    %v196 = vld [vmem:[#allocation7 + $0xf0] sm:$0xf]
    %v197 = vld [vmem:[#allocation7 + $0xf4] sm:$0xf]
    %v198 = vld [vmem:[#allocation7 + $0xf8] sm:$0xf]
    %v199 = vld [vmem:[#allocation7 + $0xfc] sm:$0xf]
    %v200 = vld [vmem:[#allocation7 + $0x100] sm:$0xf]
    %v201 = vld [vmem:[#allocation7 + $0x104] sm:$0xf]
    %v202 = vld [vmem:[#allocation7 + $0x108] sm:$0xf]
    %v203 = vld [vmem:[#allocation7 + $0x10c] sm:$0xf]
    %v204 = vld [vmem:[#allocation7 + $0x110] sm:$0xf]
    %v205 = vld [vmem:[#allocation7 + $0x114] sm:$0xf]
    %v206 = vld [vmem:[#allocation7 + $0x118] sm:$0xf]
    %v207 = vld [vmem:[#allocation7 + $0x11c] sm:$0xf]
    %v208 = vld [vmem:[#allocation7 + $0x120] sm:$0xf]
    %v209 = vld [vmem:[#allocation7 + $0x124] sm:$0xf]
    %v210 = vld [vmem:[#allocation7 + $0x128] sm:$0xf]
    %v211 = vld [vmem:[#allocation7 + $0x12c] sm:$0xf]
    %v212 = vld [vmem:[#allocation7 + $0x130] sm:$0xf]
    %v213 = vld [vmem:[#allocation7 + $0x134] sm:$0xf]
    %v214 = vld [vmem:[#allocation7 + $0x138] sm:$0xf]
    %v215 = vld [vmem:[#allocation7 + $0x13c] sm:$0xf]
    %v216 = vld [vmem:[#allocation7 + $0x140] sm:$0xf]
    %v217 = vld [vmem:[#allocation7 + $0x144] sm:$0xf]
    %v218 = vld [vmem:[#allocation7 + $0x148] sm:$0xf]
    %v219 = vld [vmem:[#allocation7 + $0x14c] sm:$0xf]
    %v220 = vld [vmem:[#allocation7 + $0x150] sm:$0xf]
    %v221 = vld [vmem:[#allocation7 + $0x154] sm:$0xf]
    %v222 = vld [vmem:[#allocation7 + $0x158] sm:$0xf]
    %v223 = vld [vmem:[#allocation7 + $0x15c] sm:$0xf]
    %v224 = vld [vmem:[#allocation7 + $0x160] sm:$0xf]
    %v225 = vld [vmem:[#allocation7 + $0x164] sm:$0xf]
    %v226 = vld [vmem:[#allocation7 + $0x168] sm:$0xf]
    %v227 = vld [vmem:[#allocation7 + $0x16c] sm:$0xf]
    %v228 = vld [vmem:[#allocation7 + $0x170] sm:$0xf]
    %v229 = vld [vmem:[#allocation7 + $0x174] sm:$0xf]
    %v230 = vld [vmem:[#allocation7 + $0x178] sm:$0xf]
    %v231 = vld [vmem:[#allocation7 + $0x17c] sm:$0xf]
    %v232 = vld [vmem:[%s3] sm:$0x1]
    %v234 = vlaneseq
    %v235 = vshrl.u32 %v234, 7
    %v236 = vsub.s32 0, %v235
    %v237 = vrot.slane %v232, %v236
    %v335 = vunpack.c.l.b16 %v136
    %v336 = vunpack.c.l.b16 %v137
    %v337 = vunpack.c.l.b16 %v138
    %v338 = vunpack.c.l.b16 %v139
    %v339 = vunpack.c.l.b16 %v140
    %v340 = vunpack.c.l.b16 %v141
    %v341 = vunpack.c.l.b16 %v142
    %v342 = vunpack.c.l.b16 %v143
    %v343 = vunpack.c.l.b16 %v144
    %v344 = vunpack.c.l.b16 %v145
    %v345 = vunpack.c.l.b16 %v146
    %v346 = vunpack.c.l.b16 %v147
    %v347 = vunpack.c.l.b16 %v148
    %v348 = vunpack.c.l.b16 %v149
    %v349 = vunpack.c.l.b16 %v150
    %v350 = vunpack.c.l.b16 %v151
    %v351 = vunpack.c.l.b16 %v152
    %v352 = vunpack.c.l.b16 %v153
    %v353 = vunpack.c.l.b16 %v154
    %v354 = vunpack.c.l.b16 %v155
    %v355 = vunpack.c.l.b16 %v156
    %v356 = vunpack.c.l.b16 %v157
    %v357 = vunpack.c.l.b16 %v158
    %v358 = vunpack.c.l.b16 %v159
    %v359 = vunpack.c.l.b16 %v160
    %v360 = vunpack.c.l.b16 %v161
    %v361 = vunpack.c.l.b16 %v162
    %v362 = vunpack.c.l.b16 %v163
    %v363 = vunpack.c.l.b16 %v164
    %v364 = vunpack.c.l.b16 %v165
    %v365 = vunpack.c.l.b16 %v166
    %v366 = vunpack.c.l.b16 %v167
    %v367 = vunpack.c.l.b16 %v168
    %v368 = vunpack.c.l.b16 %v169
    %v369 = vunpack.c.l.b16 %v170
    %v370 = vunpack.c.l.b16 %v171
    %v371 = vunpack.c.l.b16 %v172
    %v372 = vunpack.c.l.b16 %v173
    %v373 = vunpack.c.l.b16 %v174
    %v374 = vunpack.c.l.b16 %v175
    %v375 = vunpack.c.l.b16 %v176
    %v376 = vunpack.c.l.b16 %v177
    %v377 = vunpack.c.l.b16 %v178
    %v378 = vunpack.c.l.b16 %v179
    %v379 = vunpack.c.l.b16 %v180
    %v380 = vunpack.c.l.b16 %v181
    %v381 = vunpack.c.l.b16 %v182
    %v382 = vunpack.c.l.b16 %v183
    %v383 = vunpack.c.l.b16 %v184
    %v384 = vunpack.c.l.b16 %v185
    %v385 = vunpack.c.l.b16 %v186
    %v386 = vunpack.c.l.b16 %v187
    %v387 = vunpack.c.l.b16 %v188
    %v388 = vunpack.c.l.b16 %v189
    %v389 = vunpack.c.l.b16 %v190
    %v390 = vunpack.c.l.b16 %v191
    %v391 = vunpack.c.l.b16 %v192
    %v392 = vunpack.c.l.b16 %v193
    %v393 = vunpack.c.l.b16 %v194
    %v394 = vunpack.c.l.b16 %v195
    %v395 = vunpack.c.l.b16 %v196
    %v396 = vunpack.c.l.b16 %v197
    %v397 = vunpack.c.l.b16 %v198
    %v398 = vunpack.c.l.b16 %v199
    %v399 = vunpack.c.l.b16 %v200
    %v400 = vunpack.c.l.b16 %v201
    %v401 = vunpack.c.l.b16 %v202
    %v402 = vunpack.c.l.b16 %v203
    %v403 = vunpack.c.l.b16 %v204
    %v404 = vunpack.c.l.b16 %v205
    %v405 = vunpack.c.l.b16 %v206
    %v406 = vunpack.c.l.b16 %v207
    %v407 = vunpack.c.l.b16 %v208
    %v408 = vunpack.c.l.b16 %v209
    %v409 = vunpack.c.l.b16 %v210
    %v410 = vunpack.c.l.b16 %v211
    %v411 = vunpack.c.l.b16 %v212
    %v412 = vunpack.c.l.b16 %v213
    %v413 = vunpack.c.l.b16 %v214
    %v414 = vunpack.c.l.b16 %v215
    %v415 = vunpack.c.l.b16 %v216
    %v416 = vunpack.c.l.b16 %v217
    %v417 = vunpack.c.l.b16 %v218
    %v418 = vunpack.c.l.b16 %v219
    %v419 = vunpack.c.l.b16 %v220
    %v420 = vunpack.c.l.b16 %v221
    %v421 = vunpack.c.l.b16 %v222
    %v422 = vunpack.c.l.b16 %v223
    %v423 = vunpack.c.l.b16 %v224
    %v424 = vunpack.c.l.b16 %v225
    %v425 = vunpack.c.l.b16 %v226
    %v426 = vunpack.c.l.b16 %v227
    %v427 = vunpack.c.l.b16 %v228
    %v428 = vunpack.c.l.b16 %v229
    %v429 = vunpack.c.l.b16 %v230
    %v430 = vunpack.c.l.b16 %v231
    %v431 = vpack.c.b16 %v336, %v335
    %v432 = vpack.c.b16 %v338, %v337
    %v433 = vpack.c.b16 %v340, %v339
    %v434 = vpack.c.b16 %v342, %v341
    %v435 = vpack.c.b16 %v344, %v343
    %v436 = vpack.c.b16 %v346, %v345
    %v437 = vpack.c.b16 %v348, %v347
    %v438 = vpack.c.b16 %v350, %v349
    %v439 = vpack.c.b16 %v352, %v351
    %v440 = vpack.c.b16 %v354, %v353
    %v441 = vpack.c.b16 %v356, %v355
    %v442 = vpack.c.b16 %v358, %v357
    %v443 = vpack.c.b16 %v360, %v359
    %v444 = vpack.c.b16 %v362, %v361
    %v445 = vpack.c.b16 %v364, %v363
    %v446 = vpack.c.b16 %v366, %v365
    %v447 = vpack.c.b16 %v368, %v367
    %v448 = vpack.c.b16 %v370, %v369
    %v449 = vpack.c.b16 %v372, %v371
    %v450 = vpack.c.b16 %v374, %v373
    %v451 = vpack.c.b16 %v376, %v375
    %v452 = vpack.c.b16 %v378, %v377
    %v453 = vpack.c.b16 %v380, %v379
    %v454 = vpack.c.b16 %v382, %v381
    %v455 = vpack.c.b16 %v384, %v383
    %v456 = vpack.c.b16 %v386, %v385
    %v457 = vpack.c.b16 %v388, %v387
    %v458 = vpack.c.b16 %v390, %v389
    %v459 = vpack.c.b16 %v392, %v391
    %v460 = vpack.c.b16 %v394, %v393
    %v461 = vpack.c.b16 %v396, %v395
    %v462 = vpack.c.b16 %v398, %v397
    %v463 = vpack.c.b16 %v400, %v399
    %v464 = vpack.c.b16 %v402, %v401
    %v465 = vpack.c.b16 %v404, %v403
    %v466 = vpack.c.b16 %v406, %v405
    %v467 = vpack.c.b16 %v408, %v407
    %v468 = vpack.c.b16 %v410, %v409
    %v469 = vpack.c.b16 %v412, %v411
    %v470 = vpack.c.b16 %v414, %v413
    %v471 = vpack.c.b16 %v416, %v415
    %v472 = vpack.c.b16 %v418, %v417
    %v473 = vpack.c.b16 %v420, %v419
    %v474 = vpack.c.b16 %v422, %v421
    %v475 = vpack.c.b16 %v424, %v423
    %v476 = vpack.c.b16 %v426, %v425
    %v477 = vpack.c.b16 %v428, %v427
    %v478 = vpack.c.b16 %v430, %v429
    %527 = vmatprep.subr.bf16.mxu0 0
    %528 = vmatpush1.bf16.msra.mxu0 %v431
    %529 = vmatprep.subr.bf16.mxu0 0
    %530 = vmatpush1.bf16.msra.mxu0 %v432
    %531 = vmatprep.subr.bf16.mxu0 0
    %532 = vmatpush1.bf16.msra.mxu0 %v433
    %533 = vmatprep.subr.bf16.mxu0 0
    %534 = vmatpush1.bf16.msra.mxu0 %v434
    %535 = vmatprep.subr.bf16.mxu0 0
    %536 = vmatpush1.bf16.msra.mxu0 %v435
    %537 = vmatprep.subr.bf16.mxu0 0
    %538 = vmatpush1.bf16.msra.mxu0 %v436
    %539 = vmatprep.subr.bf16.mxu0 0
    %540 = vmatpush1.bf16.msra.mxu0 %v437
    %541 = vmatprep.subr.bf16.mxu0 0
    %542 = vmatpush1.bf16.msra.mxu0 %v438
    %543 = vmatprep.subr.bf16.mxu0 0
    %544 = vmatpush1.bf16.msra.mxu0 %v439
    %545 = vmatprep.subr.bf16.mxu0 0
    %546 = vmatpush1.bf16.msra.mxu0 %v440
    %547 = vmatprep.subr.bf16.mxu0 0
    %548 = vmatpush1.bf16.msra.mxu0 %v441
    %549 = vmatprep.subr.bf16.mxu0 0
    %550 = vmatpush1.bf16.msra.mxu0 %v442
    %551 = vmatprep.subr.bf16.mxu0 0
    %552 = vmatpush1.bf16.msra.mxu0 %v443
    %553 = vmatprep.subr.bf16.mxu0 0
    %554 = vmatpush1.bf16.msra.mxu0 %v444
    %555 = vmatprep.subr.bf16.mxu0 0
    %556 = vmatpush1.bf16.msra.mxu0 %v445
    %557 = vmatprep.subr.bf16.mxu0 0
    %558 = vmatpush1.bf16.msra.mxu0 %v446
    %559 = vmatprep.mubr.bf16.mxu0 %v131
    %560 = vmatmul.mubr.bf16.gmra.mrb[0].mxu0 %v130
    %v561 = vpop.f32.mrb[0].mxu0
    %v562 = vadd.f32 %v237, %v561
    %v563 = vpop.f32.mrb[0].mxu0
    %v564 = vpop.f32.mrb[0].mxu0
    %v565 = vpop.f32.mrb[0].mxu0
    %566 = vdwg.mxu0
    %567 = vmatprep.subr.bf16.mxu0 0
    %568 = vmatpush1.bf16.msra.mxu0 %v447
    %569 = vmatprep.subr.bf16.mxu0 0
    %570 = vmatpush1.bf16.msra.mxu0 %v448
    %571 = vmatprep.subr.bf16.mxu0 0
    %572 = vmatpush1.bf16.msra.mxu0 %v449
    %573 = vmatprep.subr.bf16.mxu0 0
    %574 = vmatpush1.bf16.msra.mxu0 %v450
    %575 = vmatprep.subr.bf16.mxu0 0
    %576 = vmatpush1.bf16.msra.mxu0 %v451
    %577 = vmatprep.subr.bf16.mxu0 0
    %578 = vmatpush1.bf16.msra.mxu0 %v452
    %579 = vmatprep.subr.bf16.mxu0 0
    %580 = vmatpush1.bf16.msra.mxu0 %v453
    %581 = vmatprep.subr.bf16.mxu0 0
    %582 = vmatpush1.bf16.msra.mxu0 %v454
    %583 = vmatprep.subr.bf16.mxu0 0
    %584 = vmatpush1.bf16.msra.mxu0 %v455
    %585 = vmatprep.subr.bf16.mxu0 0
    %586 = vmatpush1.bf16.msra.mxu0 %v456
    %587 = vmatprep.subr.bf16.mxu0 0
    %588 = vmatpush1.bf16.msra.mxu0 %v457
    %589 = vmatprep.subr.bf16.mxu0 0
    %590 = vmatpush1.bf16.msra.mxu0 %v458
    %591 = vmatprep.subr.bf16.mxu0 0
    %592 = vmatpush1.bf16.msra.mxu0 %v459
    %593 = vmatprep.subr.bf16.mxu0 0
    %594 = vmatpush1.bf16.msra.mxu0 %v460
    %595 = vmatprep.subr.bf16.mxu0 0
    %596 = vmatpush1.bf16.msra.mxu0 %v461
    %597 = vmatprep.subr.bf16.mxu0 0
    %598 = vmatpush1.bf16.msra.mxu0 %v462
    %599 = vmatprep.mubr.bf16.mxu0 %v133
    %600 = vmatmul.mubr.bf16.gmra.mrb[0].mxu0 %v132
    %v601 = vpop.f32.mrb[0].mxu0
    %v602 = vadd.f32 %v562, %v601
    %v603 = vpop.f32.mrb[0].mxu0
    %v604 = vpop.f32.mrb[0].mxu0
    %v605 = vpop.f32.mrb[0].mxu0
    %606 = vdwg.mxu0
    %607 = vmatprep.subr.bf16.mxu0 0
    %608 = vmatpush1.bf16.msra.mxu0 %v463
    %609 = vmatprep.subr.bf16.mxu0 0
    %610 = vmatpush1.bf16.msra.mxu0 %v464
    %611 = vmatprep.subr.bf16.mxu0 0
    %612 = vmatpush1.bf16.msra.mxu0 %v465
    %613 = vmatprep.subr.bf16.mxu0 0
    %614 = vmatpush1.bf16.msra.mxu0 %v466
    %615 = vmatprep.subr.bf16.mxu0 0
    %616 = vmatpush1.bf16.msra.mxu0 %v467
    %617 = vmatprep.subr.bf16.mxu0 0
    %618 = vmatpush1.bf16.msra.mxu0 %v468
    %619 = vmatprep.subr.bf16.mxu0 0
    %620 = vmatpush1.bf16.msra.mxu0 %v469
    %621 = vmatprep.subr.bf16.mxu0 0
    %622 = vmatpush1.bf16.msra.mxu0 %v470
    %623 = vmatprep.subr.bf16.mxu0 0
    %624 = vmatpush1.bf16.msra.mxu0 %v471
    %625 = vmatprep.subr.bf16.mxu0 0
    %626 = vmatpush1.bf16.msra.mxu0 %v472
    %627 = vmatprep.subr.bf16.mxu0 0
    %628 = vmatpush1.bf16.msra.mxu0 %v473
    %629 = vmatprep.subr.bf16.mxu0 0
    %630 = vmatpush1.bf16.msra.mxu0 %v474
    %631 = vmatprep.subr.bf16.mxu0 0
    %632 = vmatpush1.bf16.msra.mxu0 %v475
    %633 = vmatprep.subr.bf16.mxu0 0
    %634 = vmatpush1.bf16.msra.mxu0 %v476
    %635 = vmatprep.subr.bf16.mxu0 0
    %636 = vmatpush1.bf16.msra.mxu0 %v477
    %637 = vmatprep.subr.bf16.mxu0 0
    %638 = vmatpush1.bf16.msra.mxu0 %v478
    %639 = vmatprep.mubr.bf16.mxu0 %v135
    %640 = vmatmul.mubr.bf16.gmra.mrb[0].mxu0 %v134
    %v641 = vpop.f32.mrb[0].mxu0
    %v642 = vadd.f32 %v602, %v641
    %v643 = vpop.f32.mrb[0].mxu0
    %v644 = vpop.f32.mrb[0].mxu0
    %v645 = vpop.f32.mrb[0].mxu0
    %646 = vdwg.mxu0
    %v647 = vmax.f32 %v642, 0.0
    %v648 = vld [vmem:[#allocation5] sm:$0xff]
    %v649 = vld [vmem:[#allocation5 + $0x8] sm:$0xff]
    %v652 = vcombine.high %v648, %v648
    %v654 = vunpack.c.l.s4 1983009808
    %v655 = vunpack.c.0.s8 %v654
    %v656 = vlaneseq
    %v657 = vshrl.u32 %v656, 7
    %v658 = vsub.s32 %v655, %v657
    %v659 = vrot.slane %v648, %v658
    %v661 = vunpack.c.l.s4 1983009808
    %v662 = vunpack.c.0.s8 %v661
    %v663 = vlaneseq
    %v664 = vshrl.u32 %v663, 7
    %v665 = vsub.s32 %v662, %v664
    %v666 = vrot.slane %v652, %v665
    %v667 = vcombine.high %v659, %v659
    %v668 = vcombine.high %v666, %v666
    %v669 = vcombine.high %v649, %v649
    %v671 = vunpack.c.l.s4 1983009808
    %v672 = vunpack.c.0.s8 %v671
    %v673 = vlaneseq
    %v674 = vshrl.u32 %v673, 7
    %v675 = vsub.s32 %v672, %v674
    %v676 = vrot.slane %v649, %v675
    %v678 = vunpack.c.l.s4 1983009808
    %v679 = vunpack.c.0.s8 %v678
    %v680 = vlaneseq
    %v681 = vshrl.u32 %v680, 7
    %v682 = vsub.s32 %v679, %v681
    %v683 = vrot.slane %v669, %v682
    %v684 = vcombine.high %v676, %v676
    %v685 = vcombine.high %v683, %v683
    %v694 = vpack.c.bf16 %v659, %v659
    %v695 = vpack.c.bf16 %v667, %v667
    %v696 = vpack.c.bf16 %v666, %v666
    %v697 = vpack.c.bf16 %v668, %v668
    %v698 = vpack.c.bf16 %v676, %v676
    %v699 = vpack.c.bf16 %v684, %v684
    %v700 = vpack.c.bf16 %v683, %v683
    %v701 = vpack.c.bf16 %v685, %v685
    %v702 = vld [vmem:[#allocation8] sm:$0xf]
    %v703 = vld [vmem:[#allocation8 + $0x4] sm:$0xf]
    %v704 = vld [vmem:[#allocation8 + $0x8] sm:$0xf]
    %v705 = vld [vmem:[#allocation8 + $0xc] sm:$0xf]
    %v706 = vld [vmem:[#allocation8 + $0x10] sm:$0xf]
    %v707 = vld [vmem:[#allocation8 + $0x14] sm:$0xf]
    %v708 = vld [vmem:[#allocation8 + $0x18] sm:$0xf]
    %v709 = vld [vmem:[#allocation8 + $0x1c] sm:$0xf]
    %v710 = vld [vmem:[#allocation8 + $0x20] sm:$0xf]
    %v711 = vld [vmem:[#allocation8 + $0x24] sm:$0xf]
    %v712 = vld [vmem:[#allocation8 + $0x28] sm:$0xf]
    %v713 = vld [vmem:[#allocation8 + $0x2c] sm:$0xf]
    %v714 = vld [vmem:[#allocation8 + $0x30] sm:$0xf]
    %v715 = vld [vmem:[#allocation8 + $0x34] sm:$0xf]
    %v716 = vld [vmem:[#allocation8 + $0x38] sm:$0xf]
    %v717 = vld [vmem:[#allocation8 + $0x3c] sm:$0xf]
    %v718 = vld [vmem:[#allocation8 + $0x40] sm:$0xf]
    %v719 = vld [vmem:[#allocation8 + $0x44] sm:$0xf]
    %v720 = vld [vmem:[#allocation8 + $0x48] sm:$0xf]
    %v721 = vld [vmem:[#allocation8 + $0x4c] sm:$0xf]
    %v722 = vld [vmem:[#allocation8 + $0x50] sm:$0xf]
    %v723 = vld [vmem:[#allocation8 + $0x54] sm:$0xf]
    %v724 = vld [vmem:[#allocation8 + $0x58] sm:$0xf]
    %v725 = vld [vmem:[#allocation8 + $0x5c] sm:$0xf]
    %v726 = vld [vmem:[#allocation8 + $0x60] sm:$0xf]
    %v727 = vld [vmem:[#allocation8 + $0x64] sm:$0xf]
    %v728 = vld [vmem:[#allocation8 + $0x68] sm:$0xf]
    %v729 = vld [vmem:[#allocation8 + $0x6c] sm:$0xf]
    %v730 = vld [vmem:[#allocation8 + $0x70] sm:$0xf]
    %v731 = vld [vmem:[#allocation8 + $0x74] sm:$0xf]
    %v732 = vld [vmem:[#allocation8 + $0x78] sm:$0xf]
    %v733 = vld [vmem:[#allocation8 + $0x7c] sm:$0xf]
    %v734 = vld [vmem:[#allocation8 + $0x80] sm:$0xf]
    %v735 = vld [vmem:[#allocation8 + $0x84] sm:$0xf]
    %v736 = vld [vmem:[#allocation8 + $0x88] sm:$0xf]
    %v737 = vld [vmem:[#allocation8 + $0x8c] sm:$0xf]
    %v738 = vld [vmem:[#allocation8 + $0x90] sm:$0xf]
    %v739 = vld [vmem:[#allocation8 + $0x94] sm:$0xf]
    %v740 = vld [vmem:[#allocation8 + $0x98] sm:$0xf]
    %v741 = vld [vmem:[#allocation8 + $0x9c] sm:$0xf]
    %v742 = vld [vmem:[#allocation8 + $0xa0] sm:$0xf]
    %v743 = vld [vmem:[#allocation8 + $0xa4] sm:$0xf]
    %v744 = vld [vmem:[#allocation8 + $0xa8] sm:$0xf]
    %v745 = vld [vmem:[#allocation8 + $0xac] sm:$0xf]
    %v746 = vld [vmem:[#allocation8 + $0xb0] sm:$0xf]
    %v747 = vld [vmem:[#allocation8 + $0xb4] sm:$0xf]
    %v748 = vld [vmem:[#allocation8 + $0xb8] sm:$0xf]
    %v749 = vld [vmem:[#allocation8 + $0xbc] sm:$0xf]
    %v750 = vld [vmem:[#allocation8 + $0xc0] sm:$0xf]
    %v751 = vld [vmem:[#allocation8 + $0xc4] sm:$0xf]
    %v752 = vld [vmem:[#allocation8 + $0xc8] sm:$0xf]
    %v753 = vld [vmem:[#allocation8 + $0xcc] sm:$0xf]
    %v754 = vld [vmem:[#allocation8 + $0xd0] sm:$0xf]
    %v755 = vld [vmem:[#allocation8 + $0xd4] sm:$0xf]
    %v756 = vld [vmem:[#allocation8 + $0xd8] sm:$0xf]
    %v757 = vld [vmem:[#allocation8 + $0xdc] sm:$0xf]
    %v758 = vld [vmem:[#allocation8 + $0xe0] sm:$0xf]
    %v759 = vld [vmem:[#allocation8 + $0xe4] sm:$0xf]
    %v760 = vld [vmem:[#allocation8 + $0xe8] sm:$0xf]
    %v761 = vld [vmem:[#allocation8 + $0xec] sm:$0xf]
    %v762 = vld [vmem:[#allocation8 + $0xf0] sm:$0xf]
    %v763 = vld [vmem:[#allocation8 + $0xf4] sm:$0xf]
    %v764 = vld [vmem:[#allocation8 + $0xf8] sm:$0xf]
    %v765 = vld [vmem:[#allocation8 + $0xfc] sm:$0xf]
    %v766 = vld [vmem:[#allocation8 + $0x100] sm:$0xf]
    %v767 = vld [vmem:[#allocation8 + $0x104] sm:$0xf]
    %v768 = vld [vmem:[#allocation8 + $0x108] sm:$0xf]
    %v769 = vld [vmem:[#allocation8 + $0x10c] sm:$0xf]
    %v770 = vld [vmem:[#allocation8 + $0x110] sm:$0xf]
    %v771 = vld [vmem:[#allocation8 + $0x114] sm:$0xf]
    %v772 = vld [vmem:[#allocation8 + $0x118] sm:$0xf]
    %v773 = vld [vmem:[#allocation8 + $0x11c] sm:$0xf]
    %v774 = vld [vmem:[#allocation8 + $0x120] sm:$0xf]
    %v775 = vld [vmem:[#allocation8 + $0x124] sm:$0xf]
    %v776 = vld [vmem:[#allocation8 + $0x128] sm:$0xf]
    %v777 = vld [vmem:[#allocation8 + $0x12c] sm:$0xf]
    %v778 = vld [vmem:[#allocation8 + $0x130] sm:$0xf]
    %v779 = vld [vmem:[#allocation8 + $0x134] sm:$0xf]
    %v780 = vld [vmem:[#allocation8 + $0x138] sm:$0xf]
    %v781 = vld [vmem:[#allocation8 + $0x13c] sm:$0xf]
    %v782 = vld [vmem:[#allocation8 + $0x140] sm:$0xf]
    %v783 = vld [vmem:[#allocation8 + $0x144] sm:$0xf]
    %v784 = vld [vmem:[#allocation8 + $0x148] sm:$0xf]
    %v785 = vld [vmem:[#allocation8 + $0x14c] sm:$0xf]
    %v786 = vld [vmem:[#allocation8 + $0x150] sm:$0xf]
    %v787 = vld [vmem:[#allocation8 + $0x154] sm:$0xf]
    %v788 = vld [vmem:[#allocation8 + $0x158] sm:$0xf]
    %v789 = vld [vmem:[#allocation8 + $0x15c] sm:$0xf]
    %v790 = vld [vmem:[#allocation8 + $0x160] sm:$0xf]
    %v791 = vld [vmem:[#allocation8 + $0x164] sm:$0xf]
    %v792 = vld [vmem:[#allocation8 + $0x168] sm:$0xf]
    %v793 = vld [vmem:[#allocation8 + $0x16c] sm:$0xf]
    %v794 = vld [vmem:[#allocation8 + $0x170] sm:$0xf]
    %v795 = vld [vmem:[#allocation8 + $0x174] sm:$0xf]
    %v796 = vld [vmem:[#allocation8 + $0x178] sm:$0xf]
    %v797 = vld [vmem:[#allocation8 + $0x17c] sm:$0xf]
    %v798 = vld [vmem:[#allocation8 + $0x180] sm:$0xf]
    %v799 = vld [vmem:[#allocation8 + $0x184] sm:$0xf]
    %v800 = vld [vmem:[#allocation8 + $0x188] sm:$0xf]
    %v801 = vld [vmem:[#allocation8 + $0x18c] sm:$0xf]
    %v802 = vld [vmem:[#allocation8 + $0x190] sm:$0xf]
    %v803 = vld [vmem:[#allocation8 + $0x194] sm:$0xf]
    %v804 = vld [vmem:[#allocation8 + $0x198] sm:$0xf]
    %v805 = vld [vmem:[#allocation8 + $0x19c] sm:$0xf]
    %v806 = vld [vmem:[#allocation8 + $0x1a0] sm:$0xf]
    %v807 = vld [vmem:[#allocation8 + $0x1a4] sm:$0xf]
    %v808 = vld [vmem:[#allocation8 + $0x1a8] sm:$0xf]
    %v809 = vld [vmem:[#allocation8 + $0x1ac] sm:$0xf]
    %v810 = vld [vmem:[#allocation8 + $0x1b0] sm:$0xf]
    %v811 = vld [vmem:[#allocation8 + $0x1b4] sm:$0xf]
    %v812 = vld [vmem:[#allocation8 + $0x1b8] sm:$0xf]
    %v813 = vld [vmem:[#allocation8 + $0x1bc] sm:$0xf]
    %v814 = vld [vmem:[#allocation8 + $0x1c0] sm:$0xf]
    %v815 = vld [vmem:[#allocation8 + $0x1c4] sm:$0xf]
    %v816 = vld [vmem:[#allocation8 + $0x1c8] sm:$0xf]
    %v817 = vld [vmem:[#allocation8 + $0x1cc] sm:$0xf]
    %v818 = vld [vmem:[#allocation8 + $0x1d0] sm:$0xf]
    %v819 = vld [vmem:[#allocation8 + $0x1d4] sm:$0xf]
    %v820 = vld [vmem:[#allocation8 + $0x1d8] sm:$0xf]
    %v821 = vld [vmem:[#allocation8 + $0x1dc] sm:$0xf]
    %v822 = vld [vmem:[#allocation8 + $0x1e0] sm:$0xf]
    %v823 = vld [vmem:[#allocation8 + $0x1e4] sm:$0xf]
    %v824 = vld [vmem:[#allocation8 + $0x1e8] sm:$0xf]
    %v825 = vld [vmem:[#allocation8 + $0x1ec] sm:$0xf]
    %v826 = vld [vmem:[#allocation8 + $0x1f0] sm:$0xf]
    %v827 = vld [vmem:[%s5] sm:$0x1]
    %v829 = vlaneseq
    %v830 = vshrl.u32 %v829, 7
    %v831 = vsub.s32 0, %v830
    %v832 = vrot.slane %v827, %v831
    %v959 = vunpack.c.l.b16 %v702
    %v960 = vunpack.c.l.b16 %v703
    %v961 = vunpack.c.l.b16 %v704
    %v962 = vunpack.c.l.b16 %v705
    %v963 = vunpack.c.l.b16 %v706
    %v964 = vunpack.c.l.b16 %v707
    %v965 = vunpack.c.l.b16 %v708
    %v966 = vunpack.c.l.b16 %v709
    %v967 = vunpack.c.l.b16 %v710
    %v968 = vunpack.c.l.b16 %v711
    %v969 = vunpack.c.l.b16 %v712
    %v970 = vunpack.c.l.b16 %v713
    %v971 = vunpack.c.l.b16 %v714
    %v972 = vunpack.c.l.b16 %v715
    %v973 = vunpack.c.l.b16 %v716
    %v974 = vunpack.c.l.b16 %v717
    %v975 = vunpack.c.l.b16 %v718
    %v976 = vunpack.c.l.b16 %v719
    %v977 = vunpack.c.l.b16 %v720
    %v978 = vunpack.c.l.b16 %v721
    %v979 = vunpack.c.l.b16 %v722
    %v980 = vunpack.c.l.b16 %v723
    %v981 = vunpack.c.l.b16 %v724
    %v982 = vunpack.c.l.b16 %v725
    %v983 = vunpack.c.l.b16 %v726
    %v984 = vunpack.c.l.b16 %v727
    %v985 = vunpack.c.l.b16 %v728
    %v986 = vunpack.c.l.b16 %v729
    %v987 = vunpack.c.l.b16 %v730
    %v988 = vunpack.c.l.b16 %v731
    %v989 = vunpack.c.l.b16 %v732
    %v990 = vunpack.c.l.b16 %v733
    %v991 = vunpack.c.l.b16 %v734
    %v992 = vunpack.c.l.b16 %v735
    %v993 = vunpack.c.l.b16 %v736
    %v994 = vunpack.c.l.b16 %v737
    %v995 = vunpack.c.l.b16 %v738
    %v996 = vunpack.c.l.b16 %v739
    %v997 = vunpack.c.l.b16 %v740
    %v998 = vunpack.c.l.b16 %v741
    %v999 = vunpack.c.l.b16 %v742
    %v1000 = vunpack.c.l.b16 %v743
    %v1001 = vunpack.c.l.b16 %v744
    %v1002 = vunpack.c.l.b16 %v745
    %v1003 = vunpack.c.l.b16 %v746
    %v1004 = vunpack.c.l.b16 %v747
    %v1005 = vunpack.c.l.b16 %v748
    %v1006 = vunpack.c.l.b16 %v749
    %v1007 = vunpack.c.l.b16 %v750
    %v1008 = vunpack.c.l.b16 %v751
    %v1009 = vunpack.c.l.b16 %v752
    %v1010 = vunpack.c.l.b16 %v753
    %v1011 = vunpack.c.l.b16 %v754
    %v1012 = vunpack.c.l.b16 %v755
    %v1013 = vunpack.c.l.b16 %v756
    %v1014 = vunpack.c.l.b16 %v757
    %v1015 = vunpack.c.l.b16 %v758
    %v1016 = vunpack.c.l.b16 %v759
    %v1017 = vunpack.c.l.b16 %v760
    %v1018 = vunpack.c.l.b16 %v761
    %v1019 = vunpack.c.l.b16 %v762
    %v1020 = vunpack.c.l.b16 %v763
    %v1021 = vunpack.c.l.b16 %v764
    %v1022 = vunpack.c.l.b16 %v765
    %v1023 = vunpack.c.l.b16 %v766
    %v1024 = vunpack.c.l.b16 %v767
    %v1025 = vunpack.c.l.b16 %v768
    %v1026 = vunpack.c.l.b16 %v769
    %v1027 = vunpack.c.l.b16 %v770
    %v1028 = vunpack.c.l.b16 %v771
    %v1029 = vunpack.c.l.b16 %v772
    %v1030 = vunpack.c.l.b16 %v773
    %v1031 = vunpack.c.l.b16 %v774
    %v1032 = vunpack.c.l.b16 %v775
    %v1033 = vunpack.c.l.b16 %v776
    %v1034 = vunpack.c.l.b16 %v777
    %v1035 = vunpack.c.l.b16 %v778
    %v1036 = vunpack.c.l.b16 %v779
    %v1037 = vunpack.c.l.b16 %v780
    %v1038 = vunpack.c.l.b16 %v781
    %v1039 = vunpack.c.l.b16 %v782
    %v1040 = vunpack.c.l.b16 %v783
    %v1041 = vunpack.c.l.b16 %v784
    %v1042 = vunpack.c.l.b16 %v785
    %v1043 = vunpack.c.l.b16 %v786
    %v1044 = vunpack.c.l.b16 %v787
    %v1045 = vunpack.c.l.b16 %v788
    %v1046 = vunpack.c.l.b16 %v789
    %v1047 = vunpack.c.l.b16 %v790
    %v1048 = vunpack.c.l.b16 %v791
    %v1049 = vunpack.c.l.b16 %v792
    %v1050 = vunpack.c.l.b16 %v793
    %v1051 = vunpack.c.l.b16 %v794
    %v1052 = vunpack.c.l.b16 %v795
    %v1053 = vunpack.c.l.b16 %v796
    %v1054 = vunpack.c.l.b16 %v797
    %v1055 = vunpack.c.l.b16 %v798
    %v1056 = vunpack.c.l.b16 %v799
    %v1057 = vunpack.c.l.b16 %v800
    %v1058 = vunpack.c.l.b16 %v801
    %v1059 = vunpack.c.l.b16 %v802
    %v1060 = vunpack.c.l.b16 %v803
    %v1061 = vunpack.c.l.b16 %v804
    %v1062 = vunpack.c.l.b16 %v805
    %v1063 = vunpack.c.l.b16 %v806
    %v1064 = vunpack.c.l.b16 %v807
    %v1065 = vunpack.c.l.b16 %v808
    %v1066 = vunpack.c.l.b16 %v809
    %v1067 = vunpack.c.l.b16 %v810
    %v1068 = vunpack.c.l.b16 %v811
    %v1069 = vunpack.c.l.b16 %v812
    %v1070 = vunpack.c.l.b16 %v813
    %v1071 = vunpack.c.l.b16 %v814
    %v1072 = vunpack.c.l.b16 %v815
    %v1073 = vunpack.c.l.b16 %v816
    %v1074 = vunpack.c.l.b16 %v817
    %v1075 = vunpack.c.l.b16 %v818
    %v1076 = vunpack.c.l.b16 %v819
    %v1077 = vunpack.c.l.b16 %v820
    %v1078 = vunpack.c.l.b16 %v821
    %v1079 = vunpack.c.l.b16 %v822
    %v1080 = vunpack.c.l.b16 %v823
    %v1081 = vunpack.c.l.b16 %v824
    %v1082 = vunpack.c.l.b16 %v825
    %v1083 = vunpack.c.l.b16 %v826
    %v1084 = vpack.c.b16 %v960, %v959
    %v1085 = vpack.c.b16 %v962, %v961
    %v1086 = vpack.c.b16 %v964, %v963
    %v1087 = vpack.c.b16 %v966, %v965
    %v1088 = vpack.c.b16 %v968, %v967
    %v1089 = vpack.c.b16 %v970, %v969
    %v1090 = vpack.c.b16 %v972, %v971
    %v1091 = vpack.c.b16 %v974, %v973
    %v1092 = vpack.c.b16 %v976, %v975
    %v1093 = vpack.c.b16 %v978, %v977
    %v1094 = vpack.c.b16 %v980, %v979
    %v1095 = vpack.c.b16 %v982, %v981
    %v1096 = vpack.c.b16 %v984, %v983
    %v1097 = vpack.c.b16 %v986, %v985
    %v1098 = vpack.c.b16 %v988, %v987
    %v1099 = vpack.c.b16 %v990, %v989
    %v1100 = vpack.c.b16 %v992, %v991
    %v1101 = vpack.c.b16 %v994, %v993
    %v1102 = vpack.c.b16 %v996, %v995
    %v1103 = vpack.c.b16 %v998, %v997
    %v1104 = vpack.c.b16 %v1000, %v999
    %v1105 = vpack.c.b16 %v1002, %v1001
    %v1106 = vpack.c.b16 %v1004, %v1003
    %v1107 = vpack.c.b16 %v1006, %v1005
    %v1108 = vpack.c.b16 %v1008, %v1007
    %v1109 = vpack.c.b16 %v1010, %v1009
    %v1110 = vpack.c.b16 %v1012, %v1011
    %v1111 = vpack.c.b16 %v1014, %v1013
    %v1112 = vpack.c.b16 %v1016, %v1015
    %v1113 = vpack.c.b16 %v1018, %v1017
    %v1114 = vpack.c.b16 %v1020, %v1019
    %v1115 = vpack.c.b16 %v1022, %v1021
    %v1116 = vpack.c.b16 %v1024, %v1023
    %v1117 = vpack.c.b16 %v1026, %v1025
    %v1118 = vpack.c.b16 %v1028, %v1027
    %v1119 = vpack.c.b16 %v1030, %v1029
    %v1120 = vpack.c.b16 %v1032, %v1031
    %v1121 = vpack.c.b16 %v1034, %v1033
    %v1122 = vpack.c.b16 %v1036, %v1035
    %v1123 = vpack.c.b16 %v1038, %v1037
    %v1124 = vpack.c.b16 %v1040, %v1039
    %v1125 = vpack.c.b16 %v1042, %v1041
    %v1126 = vpack.c.b16 %v1044, %v1043
    %v1127 = vpack.c.b16 %v1046, %v1045
    %v1128 = vpack.c.b16 %v1048, %v1047
    %v1129 = vpack.c.b16 %v1050, %v1049
    %v1130 = vpack.c.b16 %v1052, %v1051
    %v1131 = vpack.c.b16 %v1054, %v1053
    %v1132 = vpack.c.b16 %v1056, %v1055
    %v1133 = vpack.c.b16 %v1058, %v1057
    %v1134 = vpack.c.b16 %v1060, %v1059
    %v1135 = vpack.c.b16 %v1062, %v1061
    %v1136 = vpack.c.b16 %v1064, %v1063
    %v1137 = vpack.c.b16 %v1066, %v1065
    %v1138 = vpack.c.b16 %v1068, %v1067
    %v1139 = vpack.c.b16 %v1070, %v1069
    %v1140 = vpack.c.b16 %v1072, %v1071
    %v1141 = vpack.c.b16 %v1074, %v1073
    %v1142 = vpack.c.b16 %v1076, %v1075
    %v1143 = vpack.c.b16 %v1078, %v1077
    %v1144 = vpack.c.b16 %v1080, %v1079
    %v1145 = vpack.c.b16 %v1082, %v1081
    %v1146 = vpack.c.b16 %v1083, %v1083
    %vm1209 = vcmask 850944
    %v1211 = vsel %vm1209, %v701, 0
    %vm1213 = vcmask 1043456
    %v1215 = vsel %vm1213, %v1146, 0
    %1217 = vmatprep.subr.bf16.mxu0 0
    %1218 = vmatpush1.bf16.msra.mxu0 %v1084
    %1219 = vmatprep.subr.bf16.mxu0 0
    %1220 = vmatpush1.bf16.msra.mxu0 %v1085
    %1221 = vmatprep.subr.bf16.mxu0 0
    %1222 = vmatpush1.bf16.msra.mxu0 %v1086
    %1223 = vmatprep.subr.bf16.mxu0 0
    %1224 = vmatpush1.bf16.msra.mxu0 %v1087
    %1225 = vmatprep.subr.bf16.mxu0 0
    %1226 = vmatpush1.bf16.msra.mxu0 %v1088
    %1227 = vmatprep.subr.bf16.mxu0 0
    %1228 = vmatpush1.bf16.msra.mxu0 %v1089
    %1229 = vmatprep.subr.bf16.mxu0 0
    %1230 = vmatpush1.bf16.msra.mxu0 %v1090
    %1231 = vmatprep.subr.bf16.mxu0 0
    %1232 = vmatpush1.bf16.msra.mxu0 %v1091
    %1233 = vmatprep.subr.bf16.mxu0 0
    %1234 = vmatpush1.bf16.msra.mxu0 %v1092
    %1235 = vmatprep.subr.bf16.mxu0 0
    %1236 = vmatpush1.bf16.msra.mxu0 %v1093
    %1237 = vmatprep.subr.bf16.mxu0 0
    %1238 = vmatpush1.bf16.msra.mxu0 %v1094
    %1239 = vmatprep.subr.bf16.mxu0 0
    %1240 = vmatpush1.bf16.msra.mxu0 %v1095
    %1241 = vmatprep.subr.bf16.mxu0 0
    %1242 = vmatpush1.bf16.msra.mxu0 %v1096
    %1243 = vmatprep.subr.bf16.mxu0 0
    %1244 = vmatpush1.bf16.msra.mxu0 %v1097
    %1245 = vmatprep.subr.bf16.mxu0 0
    %1246 = vmatpush1.bf16.msra.mxu0 %v1098
    %1247 = vmatprep.subr.bf16.mxu0 0
    %1248 = vmatpush1.bf16.msra.mxu0 %v1099
    %1249 = vmatprep.mubr.bf16.mxu0 %v695
    %1250 = vmatmul.mubr.bf16.gmra.mrb[0].mxu0 %v694
    %v1251 = vpop.f32.mrb[0].mxu0
    %v1252 = vadd.f32 %v832, %v1251
    %v1253 = vpop.f32.mrb[0].mxu0
    %v1254 = vpop.f32.mrb[0].mxu0
    %v1255 = vpop.f32.mrb[0].mxu0
    %1256 = vdwg.mxu0
    %1257 = vmatprep.subr.bf16.mxu0 0
    %1258 = vmatpush1.bf16.msra.mxu0 %v1100
    %1259 = vmatprep.subr.bf16.mxu0 0
    %1260 = vmatpush1.bf16.msra.mxu0 %v1101
    %1261 = vmatprep.subr.bf16.mxu0 0
    %1262 = vmatpush1.bf16.msra.mxu0 %v1102
    %1263 = vmatprep.subr.bf16.mxu0 0
    %1264 = vmatpush1.bf16.msra.mxu0 %v1103
    %1265 = vmatprep.subr.bf16.mxu0 0
    %1266 = vmatpush1.bf16.msra.mxu0 %v1104
    %1267 = vmatprep.subr.bf16.mxu0 0
    %1268 = vmatpush1.bf16.msra.mxu0 %v1105
    %1269 = vmatprep.subr.bf16.mxu0 0
    %1270 = vmatpush1.bf16.msra.mxu0 %v1106
    %1271 = vmatprep.subr.bf16.mxu0 0
    %1272 = vmatpush1.bf16.msra.mxu0 %v1107
    %1273 = vmatprep.subr.bf16.mxu0 0
    %1274 = vmatpush1.bf16.msra.mxu0 %v1108
    %1275 = vmatprep.subr.bf16.mxu0 0
    %1276 = vmatpush1.bf16.msra.mxu0 %v1109
    %1277 = vmatprep.subr.bf16.mxu0 0
    %1278 = vmatpush1.bf16.msra.mxu0 %v1110
    %1279 = vmatprep.subr.bf16.mxu0 0
    %1280 = vmatpush1.bf16.msra.mxu0 %v1111
    %1281 = vmatprep.subr.bf16.mxu0 0
    %1282 = vmatpush1.bf16.msra.mxu0 %v1112
    %1283 = vmatprep.subr.bf16.mxu0 0
    %1284 = vmatpush1.bf16.msra.mxu0 %v1113
    %1285 = vmatprep.subr.bf16.mxu0 0
    %1286 = vmatpush1.bf16.msra.mxu0 %v1114
    %1287 = vmatprep.subr.bf16.mxu0 0
    %1288 = vmatpush1.bf16.msra.mxu0 %v1115
    %1289 = vmatprep.mubr.bf16.mxu0 %v697
    %1290 = vmatmul.mubr.bf16.gmra.mrb[0].mxu0 %v696
    %v1291 = vpop.f32.mrb[0].mxu0
    %v1292 = vadd.f32 %v1252, %v1291
    %v1293 = vpop.f32.mrb[0].mxu0
    %v1294 = vpop.f32.mrb[0].mxu0
    %v1295 = vpop.f32.mrb[0].mxu0
    %1296 = vdwg.mxu0
    %1297 = vmatprep.subr.bf16.mxu0 0
    %1298 = vmatpush1.bf16.msra.mxu0 %v1116
    %1299 = vmatprep.subr.bf16.mxu0 0
    %1300 = vmatpush1.bf16.msra.mxu0 %v1117
    %1301 = vmatprep.subr.bf16.mxu0 0
    %1302 = vmatpush1.bf16.msra.mxu0 %v1118
    %1303 = vmatprep.subr.bf16.mxu0 0
    %1304 = vmatpush1.bf16.msra.mxu0 %v1119
    %1305 = vmatprep.subr.bf16.mxu0 0
    %1306 = vmatpush1.bf16.msra.mxu0 %v1120
    %1307 = vmatprep.subr.bf16.mxu0 0
    %1308 = vmatpush1.bf16.msra.mxu0 %v1121
    %1309 = vmatprep.subr.bf16.mxu0 0
    %1310 = vmatpush1.bf16.msra.mxu0 %v1122
    %1311 = vmatprep.subr.bf16.mxu0 0
    %1312 = vmatpush1.bf16.msra.mxu0 %v1123
    %1313 = vmatprep.subr.bf16.mxu0 0
    %1314 = vmatpush1.bf16.msra.mxu0 %v1124
    %1315 = vmatprep.subr.bf16.mxu0 0
    %1316 = vmatpush1.bf16.msra.mxu0 %v1125
    %1317 = vmatprep.subr.bf16.mxu0 0
    %1318 = vmatpush1.bf16.msra.mxu0 %v1126
    %1319 = vmatprep.subr.bf16.mxu0 0
    %1320 = vmatpush1.bf16.msra.mxu0 %v1127
    %1321 = vmatprep.subr.bf16.mxu0 0
    %1322 = vmatpush1.bf16.msra.mxu0 %v1128
    %1323 = vmatprep.subr.bf16.mxu0 0
    %1324 = vmatpush1.bf16.msra.mxu0 %v1129
    %1325 = vmatprep.subr.bf16.mxu0 0
    %1326 = vmatpush1.bf16.msra.mxu0 %v1130
    %1327 = vmatprep.subr.bf16.mxu0 0
    %1328 = vmatpush1.bf16.msra.mxu0 %v1131
    %1329 = vmatprep.mubr.bf16.mxu0 %v699
    %1330 = vmatmul.mubr.bf16.gmra.mrb[0].mxu0 %v698
    %v1331 = vpop.f32.mrb[0].mxu0
    %v1332 = vadd.f32 %v1292, %v1331
    %v1333 = vpop.f32.mrb[0].mxu0
    %v1334 = vpop.f32.mrb[0].mxu0
    %v1335 = vpop.f32.mrb[0].mxu0
    %1336 = vdwg.mxu0
    %1337 = vmatprep.subr.bf16.mxu0 0
    %1338 = vmatpush1.bf16.msra.mxu0 %v1132
    %1339 = vmatprep.subr.bf16.mxu0 0
    %1340 = vmatpush1.bf16.msra.mxu0 %v1133
    %1341 = vmatprep.subr.bf16.mxu0 0
    %1342 = vmatpush1.bf16.msra.mxu0 %v1134
    %1343 = vmatprep.subr.bf16.mxu0 0
    %1344 = vmatpush1.bf16.msra.mxu0 %v1135
    %1345 = vmatprep.subr.bf16.mxu0 0
    %1346 = vmatpush1.bf16.msra.mxu0 %v1136
    %1347 = vmatprep.subr.bf16.mxu0 0
    %1348 = vmatpush1.bf16.msra.mxu0 %v1137
    %1349 = vmatprep.subr.bf16.mxu0 0
    %1350 = vmatpush1.bf16.msra.mxu0 %v1138
    %1351 = vmatprep.subr.bf16.mxu0 0
    %1352 = vmatpush1.bf16.msra.mxu0 %v1139
    %1353 = vmatprep.subr.bf16.mxu0 0
    %1354 = vmatpush1.bf16.msra.mxu0 %v1140
    %1355 = vmatprep.subr.bf16.mxu0 0
    %1356 = vmatpush1.bf16.msra.mxu0 %v1141
    %1357 = vmatprep.subr.bf16.mxu0 0
    %1358 = vmatpush1.bf16.msra.mxu0 %v1142
    %1359 = vmatprep.subr.bf16.mxu0 0
    %1360 = vmatpush1.bf16.msra.mxu0 %v1143
    %1361 = vmatprep.subr.bf16.mxu0 0
    %1362 = vmatpush1.bf16.msra.mxu0 %v1144
    %1363 = vmatprep.subr.bf16.mxu0 0
    %1364 = vmatpush1.bf16.msra.mxu0 %v1145
    %1365 = vmatprep.subr.bf16.mxu0 0
    %1366 = vmatpush1.bf16.msra.mxu0 %v1215
    %1367 = vmatprep.subr.bf16.mxu0 0
    %1368 = vmatpush1.bf16.msra.mxu0 0
    %1369 = vmatprep.mubr.bf16.mxu0 %v1211
    %1370 = vmatmul.mubr.bf16.gmra.mrb[0].mxu0 %v700
    %v1371 = vpop.f32.mrb[0].mxu0
    %v1372 = vadd.f32 %v1332, %v1371
    %v1373 = vpop.f32.mrb[0].mxu0
    %v1374 = vpop.f32.mrb[0].mxu0
    %v1375 = vpop.f32.mrb[0].mxu0
    %1376 = vdwg.mxu0
    %v1377 = vmax.f32 %v1372, 0.0
    %v1378 = vpack.c.bf16 %v647, %v647
    %v1379 = vpack.c.bf16 %v1377, %v1377
    %v1380 = vld [vmem:[#allocation10] sm:$0xf]
    %v1381 = vld [vmem:[#allocation10 + $0x4] sm:$0xf]
    %v1382 = vld [vmem:[#allocation10 + $0x8] sm:$0xf]
    %v1383 = vld [vmem:[#allocation10 + $0xc] sm:$0xf]
    %v1384 = vld [vmem:[#allocation10 + $0x10] sm:$0xf]
    %v1385 = vld [vmem:[#allocation10 + $0x14] sm:$0xf]
    %v1386 = vld [vmem:[#allocation10 + $0x18] sm:$0xf]
    %v1387 = vld [vmem:[#allocation10 + $0x1c] sm:$0xf]
    %v1388 = vld [vmem:[#allocation10 + $0x20] sm:$0xf]
    %v1389 = vld [vmem:[#allocation10 + $0x24] sm:$0xf]
    %v1390 = vld [vmem:[#allocation10 + $0x28] sm:$0xf]
    %v1391 = vld [vmem:[#allocation10 + $0x2c] sm:$0xf]
    %v1392 = vld [vmem:[#allocation10 + $0x30] sm:$0xf]
    %v1393 = vld [vmem:[#allocation10 + $0x34] sm:$0xf]
    %v1394 = vld [vmem:[#allocation10 + $0x38] sm:$0xf]
    %v1395 = vld [vmem:[#allocation10 + $0x3c] sm:$0xf]
    %v1396 = vld [vmem:[#allocation10 + $0x40] sm:$0xf]
    %v1397 = vld [vmem:[#allocation10 + $0x44] sm:$0xf]
    %v1398 = vld [vmem:[#allocation10 + $0x48] sm:$0xf]
    %v1399 = vld [vmem:[#allocation10 + $0x4c] sm:$0xf]
    %v1400 = vld [vmem:[#allocation10 + $0x50] sm:$0xf]
    %v1401 = vld [vmem:[#allocation10 + $0x54] sm:$0xf]
    %v1402 = vld [vmem:[#allocation10 + $0x58] sm:$0xf]
    %v1403 = vld [vmem:[#allocation10 + $0x5c] sm:$0xf]
    %v1404 = vld [vmem:[#allocation10 + $0x60] sm:$0xf]
    %v1405 = vld [vmem:[#allocation10 + $0x64] sm:$0xf]
    %v1406 = vld [vmem:[#allocation10 + $0x68] sm:$0xf]
    %v1407 = vld [vmem:[#allocation10 + $0x6c] sm:$0xf]
    %v1408 = vld [vmem:[#allocation10 + $0x70] sm:$0xf]
    %v1409 = vld [vmem:[#allocation10 + $0x74] sm:$0xf]
    %v1410 = vld [vmem:[#allocation10 + $0x78] sm:$0xf]
    %v1411 = vld [vmem:[#allocation10 + $0x7c] sm:$0xf]
    %v1412 = vld [vmem:[%s7] sm:$0x1]
    %v1414 = vlaneseq
    %v1415 = vshrl.u32 %v1414, 7
    %v1416 = vsub.s32 0, %v1415
    %v1417 = vrot.slane %v1412, %v1416
    %v1451 = vunpack.c.l.b16 %v1380
    %v1452 = vunpack.c.l.b16 %v1381
    %v1453 = vunpack.c.l.b16 %v1382
    %v1454 = vunpack.c.l.b16 %v1383
    %v1455 = vunpack.c.l.b16 %v1384
    %v1456 = vunpack.c.l.b16 %v1385
    %v1457 = vunpack.c.l.b16 %v1386
    %v1458 = vunpack.c.l.b16 %v1387
    %v1459 = vunpack.c.l.b16 %v1388
    %v1460 = vunpack.c.l.b16 %v1389
    %v1461 = vunpack.c.l.b16 %v1390
    %v1462 = vunpack.c.l.b16 %v1391
    %v1463 = vunpack.c.l.b16 %v1392
    %v1464 = vunpack.c.l.b16 %v1393
    %v1465 = vunpack.c.l.b16 %v1394
    %v1466 = vunpack.c.l.b16 %v1395
    %v1467 = vunpack.c.l.b16 %v1396
    %v1468 = vunpack.c.l.b16 %v1397
    %v1469 = vunpack.c.l.b16 %v1398
    %v1470 = vunpack.c.l.b16 %v1399
    %v1471 = vunpack.c.l.b16 %v1400
    %v1472 = vunpack.c.l.b16 %v1401
    %v1473 = vunpack.c.l.b16 %v1402
    %v1474 = vunpack.c.l.b16 %v1403
    %v1475 = vunpack.c.l.b16 %v1404
    %v1476 = vunpack.c.l.b16 %v1405
    %v1477 = vunpack.c.l.b16 %v1406
    %v1478 = vunpack.c.l.b16 %v1407
    %v1479 = vunpack.c.l.b16 %v1408
    %v1480 = vunpack.c.l.b16 %v1409
    %v1481 = vunpack.c.l.b16 %v1410
    %v1482 = vunpack.c.l.b16 %v1411
    %v1483 = vpack.c.b16 %v1452, %v1451
    %v1484 = vpack.c.b16 %v1454, %v1453
    %v1485 = vpack.c.b16 %v1456, %v1455
    %v1486 = vpack.c.b16 %v1458, %v1457
    %v1487 = vpack.c.b16 %v1460, %v1459
    %v1488 = vpack.c.b16 %v1462, %v1461
    %v1489 = vpack.c.b16 %v1464, %v1463
    %v1490 = vpack.c.b16 %v1466, %v1465
    %v1491 = vpack.c.b16 %v1468, %v1467
    %v1492 = vpack.c.b16 %v1470, %v1469
    %v1493 = vpack.c.b16 %v1472, %v1471
    %v1494 = vpack.c.b16 %v1474, %v1473
    %v1495 = vpack.c.b16 %v1476, %v1475
    %v1496 = vpack.c.b16 %v1478, %v1477
    %v1497 = vpack.c.b16 %v1480, %v1479
    %v1498 = vpack.c.b16 %v1482, %v1481
    %1515 = vmatprep.subr.bf16.mxu0 0
    %1516 = vmatpush1.bf16.msra.mxu0 %v1483
    %1517 = vmatprep.subr.bf16.mxu0 0
    %1518 = vmatpush1.bf16.msra.mxu0 %v1484
    %1519 = vmatprep.subr.bf16.mxu0 0
    %1520 = vmatpush1.bf16.msra.mxu0 %v1485
    %1521 = vmatprep.subr.bf16.mxu0 0
    %1522 = vmatpush1.bf16.msra.mxu0 %v1486
    %1523 = vmatprep.subr.bf16.mxu0 0
    %1524 = vmatpush1.bf16.msra.mxu0 %v1487
    %1525 = vmatprep.subr.bf16.mxu0 0
    %1526 = vmatpush1.bf16.msra.mxu0 %v1488
    %1527 = vmatprep.subr.bf16.mxu0 0
    %1528 = vmatpush1.bf16.msra.mxu0 %v1489
    %1529 = vmatprep.subr.bf16.mxu0 0
    %1530 = vmatpush1.bf16.msra.mxu0 %v1490
    %1531 = vmatprep.subr.bf16.mxu0 0
    %1532 = vmatpush1.bf16.msra.mxu0 %v1491
    %1533 = vmatprep.subr.bf16.mxu0 0
    %1534 = vmatpush1.bf16.msra.mxu0 %v1492
    %1535 = vmatprep.subr.bf16.mxu0 0
    %1536 = vmatpush1.bf16.msra.mxu0 %v1493
    %1537 = vmatprep.subr.bf16.mxu0 0
    %1538 = vmatpush1.bf16.msra.mxu0 %v1494
    %1539 = vmatprep.subr.bf16.mxu0 0
    %1540 = vmatpush1.bf16.msra.mxu0 %v1495
    %1541 = vmatprep.subr.bf16.mxu0 0
    %1542 = vmatpush1.bf16.msra.mxu0 %v1496
    %1543 = vmatprep.subr.bf16.mxu0 0
    %1544 = vmatpush1.bf16.msra.mxu0 %v1497
    %1545 = vmatprep.subr.bf16.mxu0 0
    %1546 = vmatpush1.bf16.msra.mxu0 %v1498
    %1547 = vmatprep.mubr.bf16.mxu0 %v1379
    %1548 = vmatmul.mubr.bf16.gmra.mrb[0].mxu0 %v1378
    %v1549 = vpop.f32.mrb[0].mxu0
    %v1550 = vadd.f32 %v1417, %v1549
    %v1551 = vpop.f32.mrb[0].mxu0
    %v1552 = vpop.f32.mrb[0].mxu0
    %v1553 = vpop.f32.mrb[0].mxu0
    %1554 = vdwg.mxu0
    %vm1555 = vcmask 17408
    %1556 = vst.msk [vmem:[#allocation11] sm:$0x3] %vm1555, %v1550
    // Predicated region
    $region54: #{tpu_custom_call.1} parent=1 // pred_check
      _
    $region55: #{tpu_custom_call.1} parent=1 // pred_check_branch
      %1558 = sbr.rel (0) target = $region57
    $region56: #{tpu_custom_call.1} parent=1 // pred_region
      %s1560 = ssub.s32 32, 32
      %1561 = vsyncadd [#allocation4], %s1560
      %s1563 = sshll.u32 [#allocation11], 4
      %s1564 = int_to_ptr.vmem [resolvable:$true] %s1563
      %1566 = dma.vmem_to_hbm [thread:$0]  %s1564, 32, %s8, [#allocation4]
    $region57: #{tpu_custom_call.1} parent=1 // pred_fallthru
      _
    // Predicated region
    $region58: #{tpu_custom_call.1} parent=1 // pred_check
      _
    $region59: #{tpu_custom_call.1} parent=1 // pred_check_branch
      %1568 = sbr.rel (0) target = $region61
    $region60: #{tpu_custom_call.1} parent=1 // pred_region
      %1569 = dma.done [#allocation4], 32
    $region61: #{tpu_custom_call.1} parent=1 // pred_fallthru
      _
    %1570 = vsyncpa [#allocation3], 1
    %1571 = vsyncpa [#allocation6], 1
    %1572 = vsyncpa [#allocation9], 1
    %1573 = vsyncpa [#allocation4], 1

</llo_original>
